<compile_context>
chip_gen: v5e
topology: v5e:2x2
jax: 0.10.0
libtpu: 0.0.40
codegen_flags: <defaults>
</compile_context>

<pallas_src>
import numpy as np
import jax
import jax.numpy as jnp
from jax.experimental import pallas as pl
from jax.experimental.pallas import tpu as pltpu


def _gauss_taps_1d(ksize, sigma):
    ax = np.arange(ksize, dtype=np.float64) - (ksize // 2)
    g = np.exp(-(ax ** 2) / (2.0 * float(sigma) ** 2))
    g = g / g.sum()                      # outer(g, g) == normalized 2D Gaussian
    return [float(t) for t in g]


def _band_matrix(n, g, P):
    """Banded matrix M (n,n) with M[r, i] = g[i - r + P]; A @ x @ B realizes the
    zero-padded 'same' separable Gaussian convolution with no explicit padding."""
    K = len(g)
    m = np.zeros((n, n), np.float32)
    for r in range(n):
        for k in range(K):
            i = r + k - P
            if 0 <= i < n:
                m[r, i] = g[k]
    return jnp.asarray(m)


def _pow_static(x, e):
    """x**e for a trace-time-static exponent without lax.pow transcendentals in
    the common cases (p==2 -> x*x, q==1 -> identity, small integer powers)."""
    e = float(e)
    if e == 1.0:
        return x
    if e == 2.0:
        return x * x
    if e == 0.5:
        return jnp.sqrt(x)
    if e.is_integer() and 0.0 < e <= 8.0:
        acc = x
        for _ in range(int(e) - 1):
            acc = acc * x
        return acc
    # general non-integer exponent: clamp so log() stays finite for x == 0
    return jnp.exp(e * jnp.log(jnp.maximum(x, 1e-20)))


def _make_cluster_loss_kernel(C, H, W, Bt, p):
    q = 1.0 / (p - 1.0)
    inv_CHW = 1.0 / float(C * H * W)

    def per_image(I_img, b_img, u_img, A, Bm):
        I_f = I_img.astype(jnp.float32)            # (H, W)
        b_f = b_img.astype(jnp.float32)            # (H, W)
        u_f = u_img.astype(jnp.float32)            # (C, H, W)

        # TODO(synk): maskCreate undefined in reference; assumed foreground = (I > 0).
        mask = (I_f > 0.0).astype(jnp.float32)

        # Zero-padded "same" Gaussian conv as two MXU matmuls: conv(x) = A @ x @ Bm.
        def gconv(x):
            h = jnp.dot(x, Bm, preferred_element_type=jnp.float32)
            return jnp.dot(A, h, preferred_element_type=jnp.float32)

        conv_mask = gconv(mask)
        conv_bm = gconv(b_f * mask)
        conv_bIm = gconv(b_f * I_f * mask)
        conv_b2m = gconv(b_f * b_f * mask)

        # partialFilter / convParFilt: conv(x*mask) / conv(mask).  Exact division
        # (review: do not stack approximate reciprocals on the loss path).
        inv_Kb = 1.0 / (conv_mask + 1e-8)
        b_cov = conv_bm * inv_Kb
        b_cov = b_cov * mask + (1.0 - mask)
        A_num = conv_bIm * inv_Kb * mask
        A_den = conv_b2m * inv_Kb * mask

        # classCenter: all C classes at once (no serialized per-class reduce chains).
        # NOTE: when W % 128 == 0 this could be a single (C,HW)@(HW,2) MXU matmul;
        # the flatten relayout is fragile for narrow W, so a vectorized reduce is used.
        up = _pow_static(u_f, p)                                     # (C, H, W)
        pn = up * A_num[None, :, :]
        pd = up * A_den[None, :, :]
        num_c = jnp.sum(jnp.sum(pn, axis=2, keepdims=True), axis=1, keepdims=True)
        den_c = jnp.sum(jnp.sum(pd, axis=2, keepdims=True), axis=1, keepdims=True)
        v = num_c / (den_c + 1e-8)                                   # (C, 1, 1)

        # Per-class distance maps, membership update and loss, fully vectorized
        # over C (no per-class VMEM scratch, no write-then-reload).
        diff = I_f[None, :, :] - v * b_cov[None, :, :]               # (C, H, W)
        Dmap = _pow_static(diff * diff, q) + 1e-9
        f_sum = jnp.sum(1.0 / Dmap, axis=0, keepdims=True)           # (1, H, W)
        new_u = 1.0 / (Dmap * f_sum + 1e-9)                          # eps placement as in reference
        d = u_f - new_u
        s = jnp.sum(jnp.sum(d * d, axis=2, keepdims=True), axis=1, keepdims=True)
        s = jnp.sum(s, axis=0, keepdims=True)                        # (1, 1, 1)
        return s[0] * inv_CHW                                        # (1, 1)

    def kernel(I_ref, b_ref, u_ref, A_ref, Bm_ref, loss_ref):
        A = A_ref[...]
        Bm = Bm_ref[...]
        # Unrolled loop over the Bt images of this block: independent chains give
        # the VLIW scheduler ILP; each image writes a lane-dense (1,128) loss tile.
        for t in range(Bt):
            val = per_image(I_ref[t], b_ref[t], u_ref[t], A, Bm)
            loss_ref[t] = jnp.broadcast_to(val, (1, 128))

    return kernel


def cluster_loss(I, u, b, p=2.0, sigma=2):
    """Pallas equivalent of ClusterLoss.forward(I, u, b, p, sigma) (forward only)."""
    B, C, H, W = u.shape
    Kbsize = 4 * int(sigma) + 1
    P = Kbsize // 2
    g = _gauss_taps_1d(Kbsize, sigma)

    # Banded Gaussian matrices (static constants, DMA'd once: block index is
    # constant across the grid).
    A = _band_matrix(H, g, P)       # (H, H) row pass
    Bm = _band_matrix(W, g, P)      # (W, W) column pass

    # Single-channel images -> (B, H, W); no spatial padding is needed because
    # the banded matmuls implement the zero-padded conv directly.
    I2 = I.reshape(B, H, W)
    b2 = b.reshape(B, H, W)

    # Batch-block size: amortize per-grid-step overhead for small images under an
    # explicit VMEM budget, while keeping >= 2 grid steps so megacore stays busy.
    itm_I = np.dtype(I.dtype).itemsize
    itm_u = np.dtype(u.dtype).itemsize
    per_img_bytes = 2 * H * W * itm_I + C * H * W * itm_u
    budget = 8 << 20
    bt_cap = max(1, min(8, budget // max(per_img_bytes, 1)))
    if B >= 2:
        bt_cap = min(bt_cap, max(1, B // 2))
    Bt = max(d for d in range(1, bt_cap + 1) if B % d == 0)
    grid = (B // Bt,)

    kernel = _make_cluster_loss_kernel(C, H, W, Bt, float(p))

    vmem_limit = int(min(112 << 20,
                         max(32 << 20,
                             4 * Bt * per_img_bytes + 4 * (H * H + W * W) + (4 << 20))))

    out = pl.pallas_call(
        kernel,
        out_shape=jax.ShapeDtypeStruct((B, 1, 128), jnp.float32),
        grid_spec=pltpu.PrefetchScalarGridSpec(
            num_scalar_prefetch=0,
            grid=grid,
            in_specs=[
                pl.BlockSpec((Bt, H, W), lambda i: (i, 0, 0)),          # I
                pl.BlockSpec((Bt, H, W), lambda i: (i, 0, 0)),          # b
                pl.BlockSpec((Bt, C, H, W), lambda i: (i, 0, 0, 0)),    # u (native dtype)
                pl.BlockSpec((H, H), lambda i: (0, 0)),                 # banded Gaussian rows
                pl.BlockSpec((W, W), lambda i: (0, 0)),                 # banded Gaussian cols
            ],
            out_specs=pl.BlockSpec((Bt, 1, 128), lambda i: (i, 0, 0)),
        ),
        compiler_params=pltpu.CompilerParams(
            dimension_semantics=("parallel",),
            vmem_limit_bytes=vmem_limit,
        ),
    )(I2, b2, u, A, Bm)

    per_image_loss = out[:, 0, 0]                     # (B,)
    return (jnp.sum(per_image_loss) / float(B)).reshape(1)


if __name__ == "__main__":
    B, C, H, W = 2, 4, 16, 16
    sigma = 2          # -> Kbsize = 9
    p = 2.0            # -> q = 1

    key = jax.random.PRNGKey(0)
    k1, k2, k3 = jax.random.split(key, 3)
    I = jax.random.uniform(k1, (B, 1, H, W), jnp.float32, minval=0.2, maxval=1.0)
    b = 1.0 + 0.1 * jax.random.normal(k2, (B, 1, H, W), jnp.float32)   # bias ~ 1
    u = jax.nn.softmax(jax.random.normal(k3, (B, C, H, W), jnp.float32), axis=1)

    loss = cluster_loss(I, u, b, p=p, sigma=sigma)
    loss = jax.block_until_ready(loss)

    assert loss.shape == (1,)
    assert bool(jnp.isfinite(loss[0]))
    print("KERNEL_OK")
</pallas_src>

<mosaic_0001>
module attributes {stable_mosaic.version = 11 : i64} {
  func.func @kernel(%arg0: i32, %arg1: memref<1x16x16xf32, #tpu.memory_space<vmem>>, %arg2: memref<1x16x16xf32, #tpu.memory_space<vmem>>, %arg3: memref<1x4x16x16xf32, #tpu.memory_space<vmem>>, %arg4: memref<16x16xf32, #tpu.memory_space<vmem>>, %arg5: memref<16x16xf32, #tpu.memory_space<vmem>>, %arg6: memref<1x1x128xf32, #tpu.memory_space<vmem>>) attributes {dimension_semantics = [#tpu.dimension_semantics<parallel>], iteration_bounds = array<i64: 2>, scalar_prefetch = 0 : i64, scratch_operands = 0 : i64, tpu.core_type = #tpu.core_type<tc>, window_params = [{transform_indices = @transform_0, window_bounds = array<i64: 1, 16, 16>}, {transform_indices = @transform_1, window_bounds = array<i64: 1, 16, 16>}, {transform_indices = @transform_2, window_bounds = array<i64: 1, 4, 16, 16>}, {pipeline_mode = #tpu.pipeline_mode<synchronous>, transform_indices = @transform_3, window_bounds = array<i64: 16, 16>}, {pipeline_mode = #tpu.pipeline_mode<synchronous>, transform_indices = @transform_4, window_bounds = array<i64: 16, 16>}, {transform_indices = @transform_5, window_bounds = array<i64: 1, 1, 128>}]} {
    %c0 = arith.constant 0 : index
    %c0_0 = arith.constant 0 : index
    %0 = vector.load %arg4[%c0, %c0_0] : memref<16x16xf32, #tpu.memory_space<vmem>>, vector<16x16xf32>
    %c0_1 = arith.constant 0 : index
    %c0_2 = arith.constant 0 : index
    %1 = vector.load %arg5[%c0_1, %c0_2] : memref<16x16xf32, #tpu.memory_space<vmem>>, vector<16x16xf32>
    %c0_3 = arith.constant 0 : index
    %c0_4 = arith.constant 0 : index
    %c0_5 = arith.constant 0 : index
    %2 = vector.load %arg1[%c0_3, %c0_4, %c0_5] : memref<1x16x16xf32, #tpu.memory_space<vmem>>, vector<1x16x16xf32>
    %3 = vector.shape_cast %2 : vector<1x16x16xf32> to vector<16x16xf32>
    %c0_6 = arith.constant 0 : index
    %c0_7 = arith.constant 0 : index
    %c0_8 = arith.constant 0 : index
    %4 = vector.load %arg2[%c0_6, %c0_7, %c0_8] : memref<1x16x16xf32, #tpu.memory_space<vmem>>, vector<1x16x16xf32>
    %5 = vector.shape_cast %4 : vector<1x16x16xf32> to vector<16x16xf32>
    %c0_9 = arith.constant 0 : index
    %c0_10 = arith.constant 0 : index
    %c0_11 = arith.constant 0 : index
    %c0_12 = arith.constant 0 : index
    %6 = vector.load %arg3[%c0_9, %c0_10, %c0_11, %c0_12] : memref<1x4x16x16xf32, #tpu.memory_space<vmem>>, vector<1x4x16x16xf32>
    %7 = vector.shape_cast %6 : vector<1x4x16x16xf32> to vector<4x16x16xf32>
    %cst = arith.constant 0.000000e+00 : f32
    %8 = vector.broadcast %cst : f32 to vector<16x16xf32>
    %9 = arith.cmpf ogt, %3, %8 : vector<16x16xf32>
    %10 = arith.extui %9 : vector<16x16xi1> to vector<16x16xi32>
    %11 = arith.sitofp %10 : vector<16x16xi32> to vector<16x16xf32>
    %cst_13 = arith.constant dense<0.000000e+00> : vector<16x16xf32>
    %12 = tpu.matmul %11, %1, %cst_13 {dimension_numbers = #tpu.dot_dimension_numbers<[1], [0], [0], [1], [0, 0, 1, 1], [], []>} : vector<16x16xf32>, vector<16x16xf32>, vector<16x16xf32> -> vector<16x16xf32>
    %cst_14 = arith.constant dense<0.000000e+00> : vector<16x16xf32>
    %13 = tpu.matmul %0, %12, %cst_14 {dimension_numbers = #tpu.dot_dimension_numbers<[1], [0], [0], [1], [0, 0, 1, 1], [], []>} : vector<16x16xf32>, vector<16x16xf32>, vector<16x16xf32> -> vector<16x16xf32>
    %14 = arith.mulf %5, %11 : vector<16x16xf32>
    %cst_15 = arith.constant dense<0.000000e+00> : vector<16x16xf32>
    %15 = tpu.matmul %14, %1, %cst_15 {dimension_numbers = #tpu.dot_dimension_numbers<[1], [0], [0], [1], [0, 0, 1, 1], [], []>} : vector<16x16xf32>, vector<16x16xf32>, vector<16x16xf32> -> vector<16x16xf32>
    %cst_16 = arith.constant dense<0.000000e+00> : vector<16x16xf32>
    %16 = tpu.matmul %0, %15, %cst_16 {dimension_numbers = #tpu.dot_dimension_numbers<[1], [0], [0], [1], [0, 0, 1, 1], [], []>} : vector<16x16xf32>, vector<16x16xf32>, vector<16x16xf32> -> vector<16x16xf32>
    %17 = arith.mulf %5, %3 : vector<16x16xf32>
    %18 = arith.mulf %17, %11 : vector<16x16xf32>
    %cst_17 = arith.constant dense<0.000000e+00> : vector<16x16xf32>
    %19 = tpu.matmul %18, %1, %cst_17 {dimension_numbers = #tpu.dot_dimension_numbers<[1], [0], [0], [1], [0, 0, 1, 1], [], []>} : vector<16x16xf32>, vector<16x16xf32>, vector<16x16xf32> -> vector<16x16xf32>
    %cst_18 = arith.constant dense<0.000000e+00> : vector<16x16xf32>
    %20 = tpu.matmul %0, %19, %cst_18 {dimension_numbers = #tpu.dot_dimension_numbers<[1], [0], [0], [1], [0, 0, 1, 1], [], []>} : vector<16x16xf32>, vector<16x16xf32>, vector<16x16xf32> -> vector<16x16xf32>
    %21 = arith.mulf %5, %5 : vector<16x16xf32>
    %22 = arith.mulf %21, %11 : vector<16x16xf32>
    %cst_19 = arith.constant dense<0.000000e+00> : vector<16x16xf32>
    %23 = tpu.matmul %22, %1, %cst_19 {dimension_numbers = #tpu.dot_dimension_numbers<[1], [0], [0], [1], [0, 0, 1, 1], [], []>} : vector<16x16xf32>, vector<16x16xf32>, vector<16x16xf32> -> vector<16x16xf32>
    %cst_20 = arith.constant dense<0.000000e+00> : vector<16x16xf32>
    %24 = tpu.matmul %0, %23, %cst_20 {dimension_numbers = #tpu.dot_dimension_numbers<[1], [0], [0], [1], [0, 0, 1, 1], [], []>} : vector<16x16xf32>, vector<16x16xf32>, vector<16x16xf32> -> vector<16x16xf32>
    %cst_21 = arith.constant 9.99999993E-9 : f32
    %25 = vector.broadcast %cst_21 : f32 to vector<16x16xf32>
    %26 = arith.addf %13, %25 : vector<16x16xf32>
    %cst_22 = arith.constant 1.000000e+00 : f32
    %27 = vector.broadcast %cst_22 : f32 to vector<16x16xf32>
    %28 = arith.divf %27, %26 : vector<16x16xf32>
    %29 = arith.mulf %16, %28 : vector<16x16xf32>
    %30 = arith.mulf %29, %11 : vector<16x16xf32>
    %cst_23 = arith.constant 1.000000e+00 : f32
    %31 = vector.broadcast %cst_23 : f32 to vector<16x16xf32>
    %32 = arith.subf %31, %11 : vector<16x16xf32>
    %33 = arith.addf %30, %32 : vector<16x16xf32>
    %34 = arith.mulf %20, %28 : vector<16x16xf32>
    %35 = arith.mulf %34, %11 : vector<16x16xf32>
    %36 = arith.mulf %24, %28 : vector<16x16xf32>
    %37 = arith.mulf %36, %11 : vector<16x16xf32>
    %38 = arith.mulf %7, %7 : vector<4x16x16xf32>
    %39 = vector.shape_cast %35 : vector<16x16xf32> to vector<1x16x16xf32>
    %40 = vector.broadcast %39 : vector<1x16x16xf32> to vector<4x16x16xf32>
    %41 = arith.mulf %38, %40 : vector<4x16x16xf32>
    %42 = vector.shape_cast %37 : vector<16x16xf32> to vector<1x16x16xf32>
    %43 = vector.broadcast %42 : vector<1x16x16xf32> to vector<4x16x16xf32>
    %44 = arith.mulf %38, %43 : vector<4x16x16xf32>
    %cst_24 = arith.constant dense<0.000000e+00> : vector<4x16xf32>
    %45 = vector.multi_reduction <add>, %41, %cst_24 [2] : vector<4x16x16xf32> to vector<4x16xf32>
    %46 = vector.shape_cast %45 : vector<4x16xf32> to vector<4x16x1xf32>
    %cst_25 = arith.constant dense<0.000000e+00> : vector<4x1xf32>
    %47 = vector.multi_reduction <add>, %46, %cst_25 [1] : vector<4x16x1xf32> to vector<4x1xf32>
    %48 = vector.shape_cast %47 : vector<4x1xf32> to vector<4x1x1xf32>
    %cst_26 = arith.constant dense<0.000000e+00> : vector<4x16xf32>
    %49 = vector.multi_reduction <add>, %44, %cst_26 [2] : vector<4x16x16xf32> to vector<4x16xf32>
    %50 = vector.shape_cast %49 : vector<4x16xf32> to vector<4x16x1xf32>
    %cst_27 = arith.constant dense<0.000000e+00> : vector<4x1xf32>
    %51 = vector.multi_reduction <add>, %50, %cst_27 [1] : vector<4x16x1xf32> to vector<4x1xf32>
    %52 = vector.shape_cast %51 : vector<4x1xf32> to vector<4x1x1xf32>
    %cst_28 = arith.constant 9.99999993E-9 : f32
    %53 = vector.broadcast %cst_28 : f32 to vector<4x1x1xf32>
    %54 = arith.addf %52, %53 : vector<4x1x1xf32>
    %55 = arith.divf %48, %54 : vector<4x1x1xf32>
    %56 = vector.shape_cast %3 : vector<16x16xf32> to vector<1x16x16xf32>
    %57 = vector.shape_cast %33 : vector<16x16xf32> to vector<1x16x16xf32>
    %58 = vector.broadcast %55 : vector<4x1x1xf32> to vector<4x16x16xf32>
    %59 = vector.broadcast %57 : vector<1x16x16xf32> to vector<4x16x16xf32>
    %60 = arith.mulf %58, %59 : vector<4x16x16xf32>
    %61 = vector.broadcast %56 : vector<1x16x16xf32> to vector<4x16x16xf32>
    %62 = arith.subf %61, %60 : vector<4x16x16xf32>
    %63 = arith.mulf %62, %62 : vector<4x16x16xf32>
    %cst_29 = arith.constant 9.99999971E-10 : f32
    %64 = vector.broadcast %cst_29 : f32 to vector<4x16x16xf32>
    %65 = arith.addf %63, %64 : vector<4x16x16xf32>
    %cst_30 = arith.constant 1.000000e+00 : f32
    %66 = vector.broadcast %cst_30 : f32 to vector<4x16x16xf32>
    %67 = arith.divf %66, %65 : vector<4x16x16xf32>
    %cst_31 = arith.constant dense<0.000000e+00> : vector<16x16xf32>
    %68 = vector.multi_reduction <add>, %67, %cst_31 [0] : vector<4x16x16xf32> to vector<16x16xf32>
    %69 = vector.shape_cast %68 : vector<16x16xf32> to vector<1x16x16xf32>
    %70 = vector.broadcast %69 : vector<1x16x16xf32> to vector<4x16x16xf32>
    %71 = arith.mulf %65, %70 : vector<4x16x16xf32>
    %cst_32 = arith.constant 9.99999971E-10 : f32
    %72 = vector.broadcast %cst_32 : f32 to vector<4x16x16xf32>
    %73 = arith.addf %71, %72 : vector<4x16x16xf32>
    %cst_33 = arith.constant 1.000000e+00 : f32
    %74 = vector.broadcast %cst_33 : f32 to vector<4x16x16xf32>
    %75 = arith.divf %74, %73 : vector<4x16x16xf32>
    %76 = arith.subf %7, %75 : vector<4x16x16xf32>
    %77 = arith.mulf %76, %76 : vector<4x16x16xf32>
    %cst_34 = arith.constant dense<0.000000e+00> : vector<4x16xf32>
    %78 = vector.multi_reduction <add>, %77, %cst_34 [2] : vector<4x16x16xf32> to vector<4x16xf32>
    %79 = vector.shape_cast %78 : vector<4x16xf32> to vector<4x16x1xf32>
    %cst_35 = arith.constant dense<0.000000e+00> : vector<4x1xf32>
    %80 = vector.multi_reduction <add>, %79, %cst_35 [1] : vector<4x16x1xf32> to vector<4x1xf32>
    %81 = vector.shape_cast %80 : vector<4x1xf32> to vector<4x1x1xf32>
    %cst_36 = arith.constant dense<0.000000e+00> : vector<1x1xf32>
    %82 = vector.multi_reduction <add>, %81, %cst_36 [0] : vector<4x1x1xf32> to vector<1x1xf32>
    %83 = vector.shape_cast %82 : vector<1x1xf32> to vector<1x1x1xf32>
    %84 = vector.shape_cast %83 : vector<1x1x1xf32> to vector<1x1xf32>
    %cst_37 = arith.constant 9.765625E-4 : f32
    %85 = vector.broadcast %cst_37 : f32 to vector<1x1xf32>
    %86 = arith.mulf %84, %85 : vector<1x1xf32>
    %87 = vector.shape_cast %86 : vector<1x1xf32> to vector<1x1xf32>
    %88 = vector.broadcast %87 : vector<1x1xf32> to vector<1x128xf32>
    %c0_38 = arith.constant 0 : index
    %c0_39 = arith.constant 0 : index
    %c0_40 = arith.constant 0 : index
    %89 = vector.load %arg6[%c0_38, %c0_39, %c0_40] : memref<1x1x128xf32, #tpu.memory_space<vmem>>, vector<1x1x128xf32>
    %90 = vector.shape_cast %89 : vector<1x1x128xf32> to vector<1x128xf32>
    %91 = vector.shape_cast %88 : vector<1x128xf32> to vector<1x1x128xf32>
    tpu.vector_store %arg6[%c0_38, %c0_39, %c0_40], %91 {strides = array<i32>} : memref<1x1x128xf32, #tpu.memory_space<vmem>>, vector<1x1x128xf32>,
    return
  }
  func.func @transform_0(%arg0: i32) -> (i32, i32, i32) {
    %c0_i32 = arith.constant 0 : i32
    %c0_i32_0 = arith.constant 0 : i32
    %c0_i32_1 = arith.constant 0 : i32
    return %arg0, %c0_i32, %c0_i32_0 : i32, i32, i32
  }
  func.func @transform_1(%arg0: i32) -> (i32, i32, i32) {
    %c0_i32 = arith.constant 0 : i32
    %c0_i32_0 = arith.constant 0 : i32
    %c0_i32_1 = arith.constant 0 : i32
    return %arg0, %c0_i32, %c0_i32_0 : i32, i32, i32
  }
  func.func @transform_2(%arg0: i32) -> (i32, i32, i32, i32) {
    %c0_i32 = arith.constant 0 : i32
    %c0_i32_0 = arith.constant 0 : i32
    %c0_i32_1 = arith.constant 0 : i32
    %c0_i32_2 = arith.constant 0 : i32
    return %arg0, %c0_i32, %c0_i32_0, %c0_i32_1 : i32, i32, i32, i32
  }
  func.func @transform_3(%arg0: i32) -> (i32, i32) {
    %c0_i32 = arith.constant 0 : i32
    %c0_i32_0 = arith.constant 0 : i32
    %c0_i32_1 = arith.constant 0 : i32
    return %c0_i32, %c0_i32_0 : i32, i32
  }
  func.func @transform_4(%arg0: i32) -> (i32, i32) {
    %c0_i32 = arith.constant 0 : i32
    %c0_i32_0 = arith.constant 0 : i32
    %c0_i32_1 = arith.constant 0 : i32
    return %c0_i32, %c0_i32_0 : i32, i32
  }
  func.func @transform_5(%arg0: i32) -> (i32, i32, i32) {
    %c0_i32 = arith.constant 0 : i32
    %c0_i32_0 = arith.constant 0 : i32
    %c0_i32_1 = arith.constant 0 : i32
    return %arg0, %c0_i32, %c0_i32_0 : i32, i32, i32
  }
}

</mosaic_0001>

<llo_original>
// kernel: tpu_custom_call.1
$region0: #{tpu_custom_call.1}
  #allocation0 [shape = 'u32[]', space=smem, size = 0x4, offset = 0x4, fixed_abs, tag = 'smem constant byte address 0x4 - core index']
  #allocation1 [shape = 'u32[72,128]{1,0:T(1,128)}', space=vmem, size = 0x9000, scoped, tag = 'internal scratch']
  %s0 = inlined_call_operand.hbm [shape: f32[2,16,16], index: 0, kind: input, shape index: {}]
  %s1 = inlined_call_operand.hbm [shape: f32[2,16,16], index: 1, kind: input, shape index: {}]
  %s2 = inlined_call_operand.hbm [shape: f32[2,4,16,16], index: 2, kind: input, shape index: {}]
  %s3 = inlined_call_operand.hbm [shape: f32[16,16], index: 3, kind: input, shape index: {}]
  %s4 = inlined_call_operand.hbm [shape: f32[16,16], index: 4, kind: input, shape index: {}]
  %s5 = inlined_call_operand.hbm [shape: f32[2,1,128], index: 5, kind: output, shape index: {}]
  %s6 = sld [smem:[#allocation0]]
  $region73: #{tpu_custom_call.1} parent=0
    _
  %s8 = ssub.s32 1, %s6
  %s9 = scalar_select 0, %s8, %s6
  $region1: #{tpu_custom_call.1} parent=0
    #allocation2 [shape = 'u8[16384]{0}', space=vmem, size = 0x4000, scoped, tag = 'input window, operand 0']
    #allocation3 [shape = 's32[2]{0}', space=sflag, size = 0x8, scoped, tag = 'scoped memory for tpu_custom_call.1']
    #allocation4 [shape = 's32[2]{0}', space=sflag, size = 0x8, scoped, tag = 'scoped memory for tpu_custom_call.1']
    #allocation5 [shape = 'u8[16384]{0}', space=vmem, size = 0x4000, scoped, tag = 'input window, operand 1']
    #allocation6 [shape = 's32[2]{0}', space=sflag, size = 0x8, scoped, tag = 'scoped memory for tpu_custom_call.1']
    #allocation7 [shape = 'u8[65536]{0}', space=vmem, size = 0x10000, scoped, tag = 'input window, operand 2']
    #allocation8 [shape = 'u8[8192]{0}', space=vmem, size = 0x2000, scoped, tag = 'input window, operand 3, single buffered']
    #allocation9 [shape = 's32[1]{0}', space=sflag, size = 0x4, scoped, tag = 'scoped memory for tpu_custom_call.1']
    #allocation10 [shape = 'u8[8192]{0}', space=vmem, size = 0x2000, scoped, tag = 'input window, operand 4, single buffered']
    #allocation11 [shape = 'u8[1024]{0}', space=vmem, size = 0x400, scoped, tag = 'output window, operand 0']
    %10 = vsyncpa [#allocation3], 0
    %s11 = scalar_lea.sflag [#allocation3], 1
    %12 = vsyncpa %s11, 0
    %13 = vsyncpa [#allocation6], 0
    %s14 = scalar_lea.sflag [#allocation6], 1
    %15 = vsyncpa %s14, 0
    %16 = vsyncpa [#allocation9], 0
    %17 = vsyncpa [#allocation4], 0
    %s18 = scalar_lea.sflag [#allocation4], 1
    %19 = vsyncpa %s18, 0
    loop: start=0, step=1, limit=4
    $region2: #{tpu_custom_call.1} parent=1 // loop_pre_header
      _
    $region3: #{tpu_custom_call.1} parent=1 // loop_header
      %s21 = sphi 0, %s25
      %p22 = scmp.ge.s32.totalorder %s21, 4
      %s31 = sphi 0, %s33
      %s34 = sphi 0, %s31
      %s35 = sphi 0, %s34
      %s51 = sphi 0, %s35
      %s57 = sphi 0, %s59
      %s60 = sphi 0, %s57
      %s61 = sphi 0, %s60
      %s77 = sphi 0, %s61
      %s83 = sphi 0, %s85
      %s86 = sphi 0, %s83
      %s87 = sphi 0, %s86
      %s103 = sphi 0, %s87
      %s107 = sphi 0, %s107
      %s109 = sphi 0, %s107
      %s110 = sphi 0, %s109
      %s124 = sphi 0, %s110
      %s128 = sphi 0, %s128
      %s130 = sphi 0, %s128
      %s131 = sphi 0, %s130
      %s145 = sphi 0, %s131
      %s151 = sphi 0, %s153
      %s154 = sphi 0, %s151
      %s155 = sphi 0, %s154
      %s171 = sphi 0, %s155
    $region4: #{tpu_custom_call.1} parent=1 // loop_header_branch
      %24 = sbr.rel (%p22) target = $region8
    $region5: #{tpu_custom_call.1} parent=1 // loop_body
      %s26 = ssub.s32 %s21, 1
      %s27 = ssub.s32 %s21, 2
      %s28 = sadd.s32 %s21, 1
      %s29 = ssub.s32 %s21, %s28
      %p30 = scmp.eq.s32.totalorder %s29, 0
      %s32 = sadd.s32 %s31, 1
      %s33 = scalar_select %p30, %s31, %s32
      %p36 = pneg %p30
      %p37 = scmp.eq.s32.totalorder %s21, 1
      %p38 = por %p36, %p37
      %p39 = scmp.ne.s32.totalorder %s31, %s34
      %p40 = scmp.eq.s32.totalorder %s21, 0
      %p41 = por %p39, %p40
      %p42 = scmp.ne.s32.totalorder %s31, %s34
      %p43 = scmp.eq.s32.totalorder %s26, 1
      %p44 = por %p42, %p43
      %p45 = scmp.ne.s32.totalorder %s34, %s35
      %p46 = scmp.eq.s32.totalorder %s26, 0
      %p47 = por %p45, %p46
      %p48 = scmp.ne.s32.totalorder %s34, %s35
      %p49 = scmp.eq.s32.totalorder %s27, 1
      %p50 = por %p48, %p49
      %p52 = scmp.ne.s32.totalorder %s35, %s51
      %p53 = scmp.eq.s32.totalorder %s27, 0
      %p54 = por %p52, %p53
      %s55 = ssub.s32 %s21, %s28
      %p56 = scmp.eq.s32.totalorder %s55, 0
      %s58 = sadd.s32 %s57, 1
      %s59 = scalar_select %p56, %s57, %s58
      %p62 = pneg %p56
      %p63 = scmp.eq.s32.totalorder %s21, 1
      %p64 = por %p62, %p63
      %p65 = scmp.ne.s32.totalorder %s57, %s60
      %p66 = scmp.eq.s32.totalorder %s21, 0
      %p67 = por %p65, %p66
      %p68 = scmp.ne.s32.totalorder %s57, %s60
      %p69 = scmp.eq.s32.totalorder %s26, 1
      %p70 = por %p68, %p69
      %p71 = scmp.ne.s32.totalorder %s60, %s61
      %p72 = scmp.eq.s32.totalorder %s26, 0
      %p73 = por %p71, %p72
      %p74 = scmp.ne.s32.totalorder %s60, %s61
      %p75 = scmp.eq.s32.totalorder %s27, 1
      %p76 = por %p74, %p75
      %p78 = scmp.ne.s32.totalorder %s61, %s77
      %p79 = scmp.eq.s32.totalorder %s27, 0
      %p80 = por %p78, %p79
      %s81 = ssub.s32 %s21, %s28
      %p82 = scmp.eq.s32.totalorder %s81, 0
      %s84 = sadd.s32 %s83, 1
      %s85 = scalar_select %p82, %s83, %s84
      %p88 = pneg %p82
      %p89 = scmp.eq.s32.totalorder %s21, 1
      %p90 = por %p88, %p89
      %p91 = scmp.ne.s32.totalorder %s83, %s86
      %p92 = scmp.eq.s32.totalorder %s21, 0
      %p93 = por %p91, %p92
      %p94 = scmp.ne.s32.totalorder %s83, %s86
      %p95 = scmp.eq.s32.totalorder %s26, 1
      %p96 = por %p94, %p95
      %p97 = scmp.ne.s32.totalorder %s86, %s87
      %p98 = scmp.eq.s32.totalorder %s26, 0
      %p99 = por %p97, %p98
      %p100 = scmp.ne.s32.totalorder %s86, %s87
      %p101 = scmp.eq.s32.totalorder %s27, 1
      %p102 = por %p100, %p101
      %p104 = scmp.ne.s32.totalorder %s87, %s103
      %p105 = scmp.eq.s32.totalorder %s27, 0
      %p106 = por %p104, %p105
      %s108 = sadd.s32 %s107, 1
      %p111 = scmp.eq.s32.totalorder %s21, 1
      %p112 = scmp.ne.s32.totalorder %s107, %s109
      %p113 = scmp.eq.s32.totalorder %s21, 0
      %p114 = por %p112, %p113
      %p115 = scmp.ne.s32.totalorder %s107, %s109
      %p116 = scmp.eq.s32.totalorder %s26, 1
      %p117 = por %p115, %p116
      %p118 = scmp.ne.s32.totalorder %s109, %s110
      %p119 = scmp.eq.s32.totalorder %s26, 0
      %p120 = por %p118, %p119
      %p121 = scmp.ne.s32.totalorder %s109, %s110
      %p122 = scmp.eq.s32.totalorder %s27, 1
      %p123 = por %p121, %p122
      %p125 = scmp.ne.s32.totalorder %s110, %s124
      %p126 = scmp.eq.s32.totalorder %s27, 0
      %p127 = por %p125, %p126
      %s129 = sadd.s32 %s128, 1
      %p132 = scmp.eq.s32.totalorder %s21, 1
      %p133 = scmp.ne.s32.totalorder %s128, %s130
      %p134 = scmp.eq.s32.totalorder %s21, 0
      %p135 = por %p133, %p134
      %p136 = scmp.ne.s32.totalorder %s128, %s130
      %p137 = scmp.eq.s32.totalorder %s26, 1
      %p138 = por %p136, %p137
      %p139 = scmp.ne.s32.totalorder %s130, %s131
      %p140 = scmp.eq.s32.totalorder %s26, 0
      %p141 = por %p139, %p140
      %p142 = scmp.ne.s32.totalorder %s130, %s131
      %p143 = scmp.eq.s32.totalorder %s27, 1
      %p144 = por %p142, %p143
      %p146 = scmp.ne.s32.totalorder %s131, %s145
      %p147 = scmp.eq.s32.totalorder %s27, 0
      %p148 = por %p146, %p147
      %s149 = ssub.s32 %s21, %s28
      %p150 = scmp.eq.s32.totalorder %s149, 0
      %s152 = sadd.s32 %s151, 1
      %s153 = scalar_select %p150, %s151, %s152
      %p156 = pneg %p150
      %p157 = scmp.eq.s32.totalorder %s21, 1
      %p158 = por %p156, %p157
      %p159 = scmp.ne.s32.totalorder %s151, %s154
      %p160 = scmp.eq.s32.totalorder %s21, 0
      %p161 = por %p159, %p160
      %p162 = scmp.ne.s32.totalorder %s151, %s154
      %p163 = scmp.eq.s32.totalorder %s26, 1
      %p164 = por %p162, %p163
      %p165 = scmp.ne.s32.totalorder %s154, %s155
      %p166 = scmp.eq.s32.totalorder %s26, 0
      %p167 = por %p165, %p166
      %p168 = scmp.ne.s32.totalorder %s154, %s155
      %p169 = scmp.eq.s32.totalorder %s27, 1
      %p170 = por %p168, %p169
      %p172 = scmp.ne.s32.totalorder %s155, %s171
      %p173 = scmp.eq.s32.totalorder %s27, 0
      %p174 = por %p172, %p173
      %p175 = scmp.le.s32.totalorder 1, %s21
      %p176 = scmp.lt.s32.totalorder %s21, 3
      %p177 = pnand %p175, %p176
      %p178 = pneg %p177
      // Predicated region
      $region9: #{tpu_custom_call.1} parent=5 // pred_check
        _
      $region10: #{tpu_custom_call.1} parent=5 // pred_check_branch
        %180 = sbr.rel (%p177) target = $region12
      $region11: #{tpu_custom_call.1} parent=5 // pred_region
        %s181 = ssub.s32 %s21, 1
        // Predicated region
        $region13: #{tpu_custom_call.1} parent=11 // pred_check
          %p182 = pneg %p120
        $region14: #{tpu_custom_call.1} parent=11 // pred_check_branch
          %184 = sbr.rel (%p182) target = $region16
        $region15: #{tpu_custom_call.1} parent=11 // pred_region
          %186 = vsyncadd [#allocation9], 0
          %s187 = sshll.u32 %s3, 4
          %s188 = int_to_ptr.hbm [resolvable:$true] %s187
          %s189 = sshll.u32 [#allocation8], 4
          %s190 = int_to_ptr.vmem [resolvable:$true] %s189
          %195 = dma.hbm_to_vmem [thread:$0]  %s188, 256, %s190, [#allocation9], 128, 128, 8
        $region16: #{tpu_custom_call.1} parent=11 // pred_fallthru
          _
        // Predicated region
        $region17: #{tpu_custom_call.1} parent=11 // pred_check
          %p196 = pneg %p141
        $region18: #{tpu_custom_call.1} parent=11 // pred_check_branch
          %198 = sbr.rel (%p196) target = $region20
        $region19: #{tpu_custom_call.1} parent=11 // pred_region
          %200 = vsyncadd [#allocation9], 0
          %s201 = sshll.u32 %s4, 4
          %s202 = int_to_ptr.hbm [resolvable:$true] %s201
          %s203 = sshll.u32 [#allocation10], 4
          %s204 = int_to_ptr.vmem [resolvable:$true] %s203
          %209 = dma.hbm_to_vmem [thread:$0]  %s202, 256, %s204, [#allocation9], 128, 128, 8
        $region20: #{tpu_custom_call.1} parent=11 // pred_fallthru
          _
      $region12: #{tpu_custom_call.1} parent=5 // pred_fallthru
        _
      %p210 = scmp.lt.s32.totalorder %s21, 2
      // Predicated region
      $region21: #{tpu_custom_call.1} parent=5 // pred_check
        %p211 = pneg %p210
      $region22: #{tpu_custom_call.1} parent=5 // pred_check_branch
        %213 = sbr.rel (%p211) target = $region24
      $region23: #{tpu_custom_call.1} parent=5 // pred_region
        // Predicated region
        $region25: #{tpu_custom_call.1} parent=23 // pred_check
          %p214 = pneg %p41
        $region26: #{tpu_custom_call.1} parent=23 // pred_check_branch
          %216 = sbr.rel (%p214) target = $region28
        $region27: #{tpu_custom_call.1} parent=23 // pred_region
          %s217 = sand.u32 %s31, 1
          %s218 = scalar_lea.sflag [#allocation3], %s217
          %s219 = sand.u32 %s31, 1
          %s220 = smul.addr %s219, 16
          %s221 = scalar_lea.vmem [#allocation2], %s220
          %223 = vsyncadd %s218, 0
          %s224 = smul.addr %s21, 2
          %s225 = smul.addr %s224, 8
          %s226 = scalar_lea.hbm %s0, %s225
          %s227 = sshll.u32 %s226, 4
          %s228 = int_to_ptr.hbm [resolvable:$true] %s227
          %s229 = sshll.u32 %s221, 4
          %s230 = int_to_ptr.vmem [resolvable:$true] %s229
          %235 = dma.hbm_to_vmem [thread:$0]  %s228, 256, %s230, %s218, 128, 128, 8
        $region28: #{tpu_custom_call.1} parent=23 // pred_fallthru
          _
        // Predicated region
        $region29: #{tpu_custom_call.1} parent=23 // pred_check
          %p236 = pneg %p67
        $region30: #{tpu_custom_call.1} parent=23 // pred_check_branch
          %238 = sbr.rel (%p236) target = $region32
        $region31: #{tpu_custom_call.1} parent=23 // pred_region
          %s239 = sand.u32 %s21, 1
          %s240 = scalar_lea.sflag [#allocation6], %s239
          %s241 = sand.u32 %s57, 1
          %s242 = smul.addr %s241, 16
          %s243 = scalar_lea.vmem [#allocation5], %s242
          %245 = vsyncadd %s240, 0
          %s246 = smul.addr %s21, 2
          %s247 = smul.addr %s246, 8
          %s248 = scalar_lea.hbm %s1, %s247
          %s249 = sshll.u32 %s248, 4
          %s250 = int_to_ptr.hbm [resolvable:$true] %s249
          %s251 = sshll.u32 %s243, 4
          %s252 = int_to_ptr.vmem [resolvable:$true] %s251
          %257 = dma.hbm_to_vmem [thread:$0]  %s250, 256, %s252, %s240, 128, 128, 8
        $region32: #{tpu_custom_call.1} parent=23 // pred_fallthru
          _
        // Predicated region
        $region33: #{tpu_custom_call.1} parent=23 // pred_check
          %p258 = pneg %p93
        $region34: #{tpu_custom_call.1} parent=23 // pred_check_branch
          %260 = sbr.rel (%p258) target = $region36
        $region35: #{tpu_custom_call.1} parent=23 // pred_region
          %s261 = sand.u32 %s21, 1
          %s262 = scalar_lea.sflag [#allocation6], %s261
          %s263 = sand.u32 %s83, 1
          %s264 = smul.addr %s263, 64
          %s265 = scalar_lea.vmem [#allocation7], %s264
          %267 = vsyncadd %s262, 0
          %s268 = smul.addr %s21, 8
          %s269 = smul.addr %s268, 8
          %s270 = scalar_lea.hbm %s2, %s269
          %s271 = sshll.u32 %s270, 4
          %s272 = int_to_ptr.hbm [resolvable:$true] %s271
          %s273 = sshll.u32 %s265, 4
          %s274 = int_to_ptr.vmem [resolvable:$true] %s273
          %279 = dma.hbm_to_vmem [thread:$0]  %s272, 1024, %s274, %s262, 128, 128, 8
        $region36: #{tpu_custom_call.1} parent=23 // pred_fallthru
          _
      $region24: #{tpu_custom_call.1} parent=5 // pred_fallthru
        _
      %p280 = scmp.le.s32.totalorder 1, %s21
      %p281 = scmp.lt.s32.totalorder %s21, 3
      %p282 = pnand %p280, %p281
      %p283 = pneg %p282
      // Predicated region
      $region37: #{tpu_custom_call.1} parent=5 // pred_check
        _
      $region38: #{tpu_custom_call.1} parent=5 // pred_check_branch
        %285 = sbr.rel (%p282) target = $region40
      $region39: #{tpu_custom_call.1} parent=5 // pred_region
        %s286 = ssub.s32 %s21, 1
        %s287 = sand.u32 %s34, 1
        %s288 = scalar_lea.sflag [#allocation3], %s287
        %s289 = sand.u32 %s34, 1
        %s290 = smul.addr %s289, 16
        %s291 = scalar_lea.vmem [#allocation2], %s290
        // Predicated region
        $region41: #{tpu_custom_call.1} parent=39 // pred_check
          %p292 = pneg %p47
        $region42: #{tpu_custom_call.1} parent=39 // pred_check_branch
          %294 = sbr.rel (%p292) target = $region44
        $region43: #{tpu_custom_call.1} parent=39 // pred_region
          %296 = dma.done %s288, 256
        $region44: #{tpu_custom_call.1} parent=39 // pred_fallthru
          _
        %s297 = sand.u32 %s26, 1
        %s298 = scalar_lea.sflag [#allocation6], %s297
        %s299 = sand.u32 %s60, 1
        %s300 = smul.addr %s299, 16
        %s301 = scalar_lea.vmem [#allocation5], %s300
        // Predicated region
        $region45: #{tpu_custom_call.1} parent=39 // pred_check
          %p302 = pneg %p73
        $region46: #{tpu_custom_call.1} parent=39 // pred_check_branch
          %304 = sbr.rel (%p302) target = $region48
        $region47: #{tpu_custom_call.1} parent=39 // pred_region
          %306 = dma.done %s298, 256
        $region48: #{tpu_custom_call.1} parent=39 // pred_fallthru
          _
        %s307 = sand.u32 %s26, 1
        %s308 = scalar_lea.sflag [#allocation6], %s307
        %s309 = sand.u32 %s86, 1
        %s310 = smul.addr %s309, 64
        %s311 = scalar_lea.vmem [#allocation7], %s310
        // Predicated region
        $region49: #{tpu_custom_call.1} parent=39 // pred_check
          %p312 = pneg %p99
        $region50: #{tpu_custom_call.1} parent=39 // pred_check_branch
          %314 = sbr.rel (%p312) target = $region52
        $region51: #{tpu_custom_call.1} parent=39 // pred_region
          %316 = dma.done %s308, 1024
        $region52: #{tpu_custom_call.1} parent=39 // pred_fallthru
          _
        // Predicated region
        $region53: #{tpu_custom_call.1} parent=39 // pred_check
          %p317 = pneg %p120
        $region54: #{tpu_custom_call.1} parent=39 // pred_check_branch
          %319 = sbr.rel (%p317) target = $region56
        $region55: #{tpu_custom_call.1} parent=39 // pred_region
          %321 = dma.done [#allocation9], 256
        $region56: #{tpu_custom_call.1} parent=39 // pred_fallthru
          _
        // Predicated region
        $region57: #{tpu_custom_call.1} parent=39 // pred_check
          %p322 = pneg %p141
        $region58: #{tpu_custom_call.1} parent=39 // pred_check_branch
          %324 = sbr.rel (%p322) target = $region60
        $region59: #{tpu_custom_call.1} parent=39 // pred_region
          %326 = dma.done [#allocation9], 256
        $region60: #{tpu_custom_call.1} parent=39 // pred_fallthru
          _
        %s327 = sand.u32 %s34, 1
        %s328 = scalar_lea.sflag [#allocation3], %s327
        %s329 = sand.u32 %s34, 1
        %s330 = smul.addr %s329, 16
        %s331 = scalar_lea.vmem [#allocation2], %s330
        %p332 = pneg %p47
        %p333 = pneg %p44
        %s334 = sand.u32 %s26, 1
        %s335 = scalar_lea.sflag [#allocation6], %s334
        %s336 = sand.u32 %s60, 1
        %s337 = smul.addr %s336, 16
        %s338 = scalar_lea.vmem [#allocation5], %s337
        %p339 = pneg %p73
        %p340 = pneg %p70
        %s341 = sand.u32 %s26, 1
        %s342 = scalar_lea.sflag [#allocation6], %s341
        %s343 = sand.u32 %s86, 1
        %s344 = smul.addr %s343, 64
        %s345 = scalar_lea.vmem [#allocation7], %s344
        %p346 = pneg %p99
        %p347 = pneg %p96
        %p348 = pneg %p120
        %p349 = pneg %p117
        %p350 = pneg %p141
        %p351 = pneg %p138
        %p352 = pneg %p167
        %p353 = pneg %p164
        %s354 = sand.u32 %s154, 1
        %s355 = scalar_lea.sflag [#allocation4], %s354
        %s356 = sand.u32 %s154, 1
        %s357 = scalar_lea.vmem [#allocation11], %s356
        %v358 = vld [vmem:[#allocation8] sm:$0xff]
        %v359 = vld [vmem:[#allocation8 + $0x8] sm:$0xff]
        %v360 = vld [vmem:[#allocation10] sm:$0xff]
        %v361 = vld [vmem:[#allocation10 + $0x8] sm:$0xff]
        %v362 = vld [vmem:[%s291] sm:$0xff]
        %v363 = vld [vmem:[%s291 + $0x8] sm:$0xff]
        %v364 = vld [vmem:[%s301] sm:$0xff]
        %v365 = vld [vmem:[%s301 + $0x8] sm:$0xff]
        %v366 = vld [vmem:[%s311] sm:$0xff]
        %v367 = vld [vmem:[%s311 + $0x8] sm:$0xff]
        %v368 = vld [vmem:[%s311 + $0x10] sm:$0xff]
        %v369 = vld [vmem:[%s311 + $0x18] sm:$0xff]
        %v370 = vld [vmem:[%s311 + $0x20] sm:$0xff]
        %v371 = vld [vmem:[%s311 + $0x28] sm:$0xff]
        %v372 = vld [vmem:[%s311 + $0x30] sm:$0xff]
        %v373 = vld [vmem:[%s311 + $0x38] sm:$0xff]
        %vm374 = vcmp.gt.f32.partialorder %v362, 0.0
        %vm375 = vcmp.gt.f32.partialorder %v363, 0.0
        %v376 = vsel %vm374, 1, 0
        %v377 = vsel %vm375, 1, 0
        %v378 = vcvt.s32.f32 %v376
        %v379 = vcvt.s32.f32 %v377
        %vm380 = vcmask 130048
        %v382 = vsel %vm380, %v378, 0
        %v385 = vsel %vm380, %v379, 0
        %387 = vmatpush.msra.mxu0 0.0
        %388 = vmatpush.msra.mxu0 0.0
        %389 = vmatpush.msra.mxu0 0.0
        %390 = vmatpush.msra.mxu0 0.0
        %391 = vmatpush.msra.mxu0 0.0
        %392 = vmatpush.msra.mxu0 0.0
        %393 = vmatpush.msra.mxu0 0.0
        %394 = vmatpush.msra.mxu0 0.0
        %395 = vmatpush.msra.mxu0 0.0
        %396 = vmatpush.msra.mxu0 0.0
        %397 = vmatpush.msra.mxu0 0.0
        %398 = vmatpush.msra.mxu0 0.0
        %399 = vmatpush.msra.mxu0 0.0
        %400 = vmatpush.msra.mxu0 0.0
        %401 = vmatpush.msra.mxu0 %v361
        %402 = vmatpush.msra.mxu0 %v360
        %403 = vmatmul.f32.gmra.mxu0 %v382
        %v404 = vpop.f32.mrf.mxu0
        %v405 = vadd.f32 0.0, %v404
        %406 = vmatmul.f32.gmra.mxu0 %v385
        %v407 = vpop.f32.mrf.mxu0
        %v408 = vadd.f32 0.0, %v407
        %409 = vdwg.mxu0
        %v410 = vmul.f32 %v364, %v378
        %v411 = vmul.f32 %v365, %v379
        %v413 = vsel %vm380, %v410, 0
        %v416 = vsel %vm380, %v411, 0
        %418 = vmatpush.msra.mxu0 0.0
        %419 = vmatpush.msra.mxu0 0.0
        %420 = vmatpush.msra.mxu0 0.0
        %421 = vmatpush.msra.mxu0 0.0
        %422 = vmatpush.msra.mxu0 0.0
        %423 = vmatpush.msra.mxu0 0.0
        %424 = vmatpush.msra.mxu0 0.0
        %425 = vmatpush.msra.mxu0 0.0
        %426 = vmatpush.msra.mxu0 0.0
        %427 = vmatpush.msra.mxu0 0.0
        %428 = vmatpush.msra.mxu0 0.0
        %429 = vmatpush.msra.mxu0 0.0
        %430 = vmatpush.msra.mxu0 0.0
        %431 = vmatpush.msra.mxu0 0.0
        %432 = vmatpush.msra.mxu0 %v361
        %433 = vmatpush.msra.mxu0 %v360
        %434 = vmatmul.f32.gmra.mxu0 %v413
        %v435 = vpop.f32.mrf.mxu0
        %v436 = vadd.f32 0.0, %v435
        %437 = vmatmul.f32.gmra.mxu0 %v416
        %v438 = vpop.f32.mrf.mxu0
        %v439 = vadd.f32 0.0, %v438
        %440 = vdwg.mxu0
        %v442 = vsel %vm380, %v358, 0
        %v445 = vsel %vm380, %v359, 0
        %447 = vmatpush.msra.mxu0 0.0
        %448 = vmatpush.msra.mxu0 0.0
        %449 = vmatpush.msra.mxu0 0.0
        %450 = vmatpush.msra.mxu0 0.0
        %451 = vmatpush.msra.mxu0 0.0
        %452 = vmatpush.msra.mxu0 0.0
        %453 = vmatpush.msra.mxu0 0.0
        %454 = vmatpush.msra.mxu0 0.0
        %455 = vmatpush.msra.mxu0 0.0
        %456 = vmatpush.msra.mxu0 0.0
        %457 = vmatpush.msra.mxu0 0.0
        %458 = vmatpush.msra.mxu0 0.0
        %459 = vmatpush.msra.mxu0 0.0
        %460 = vmatpush.msra.mxu0 0.0
        %461 = vmatpush.msra.mxu0 %v439
        %462 = vmatpush.msra.mxu0 %v436
        %463 = vmatmul.f32.gmra.mxu0 %v442
        %v464 = vpop.f32.mrf.mxu0
        %v465 = vadd.f32 0.0, %v464
        %466 = vmatmul.f32.gmra.mxu0 %v445
        %v467 = vpop.f32.mrf.mxu0
        %v468 = vadd.f32 0.0, %v467
        %469 = vdwg.mxu0
        %v470 = vmul.f32 %v364, %v362
        %v471 = vmul.f32 %v365, %v363
        %v472 = vmul.f32 %v470, %v378
        %v473 = vmul.f32 %v471, %v379
        %v475 = vsel %vm380, %v472, 0
        %v478 = vsel %vm380, %v473, 0
        %480 = vmatpush.msra.mxu0 0.0
        %481 = vmatpush.msra.mxu0 0.0
        %482 = vmatpush.msra.mxu0 0.0
        %483 = vmatpush.msra.mxu0 0.0
        %484 = vmatpush.msra.mxu0 0.0
        %485 = vmatpush.msra.mxu0 0.0
        %486 = vmatpush.msra.mxu0 0.0
        %487 = vmatpush.msra.mxu0 0.0
        %488 = vmatpush.msra.mxu0 0.0
        %489 = vmatpush.msra.mxu0 0.0
        %490 = vmatpush.msra.mxu0 0.0
        %491 = vmatpush.msra.mxu0 0.0
        %492 = vmatpush.msra.mxu0 0.0
        %493 = vmatpush.msra.mxu0 0.0
        %494 = vmatpush.msra.mxu0 %v361
        %495 = vmatpush.msra.mxu0 %v360
        %496 = vmatmul.f32.gmra.mxu0 %v475
        %v497 = vpop.f32.mrf.mxu0
        %v498 = vadd.f32 0.0, %v497
        %499 = vmatmul.f32.gmra.mxu0 %v478
        %v500 = vpop.f32.mrf.mxu0
        %v501 = vadd.f32 0.0, %v500
        %502 = vdwg.mxu0
        %503 = vmatpush.msra.mxu0 0.0
        %504 = vmatpush.msra.mxu0 0.0
        %505 = vmatpush.msra.mxu0 0.0
        %506 = vmatpush.msra.mxu0 0.0
        %507 = vmatpush.msra.mxu0 0.0
        %508 = vmatpush.msra.mxu0 0.0
        %509 = vmatpush.msra.mxu0 0.0
        %510 = vmatpush.msra.mxu0 0.0
        %511 = vmatpush.msra.mxu0 0.0
        %512 = vmatpush.msra.mxu0 0.0
        %513 = vmatpush.msra.mxu0 0.0
        %514 = vmatpush.msra.mxu0 0.0
        %515 = vmatpush.msra.mxu0 0.0
        %516 = vmatpush.msra.mxu0 0.0
        %517 = vmatpush.msra.mxu0 %v501
        %518 = vmatpush.msra.mxu0 %v498
        %519 = vmatmul.f32.gmra.mxu0 %v442
        %v520 = vpop.f32.mrf.mxu0
        %v521 = vadd.f32 0.0, %v520
        %522 = vmatmul.f32.gmra.mxu0 %v445
        %v523 = vpop.f32.mrf.mxu0
        %v524 = vadd.f32 0.0, %v523
        %525 = vdwg.mxu0
        %v526 = vmul.f32 %v364, %v364
        %v527 = vmul.f32 %v365, %v365
        %v528 = vmul.f32 %v526, %v378
        %v529 = vmul.f32 %v527, %v379
        %v531 = vsel %vm380, %v528, 0
        %v534 = vsel %vm380, %v529, 0
        %536 = vmatpush.msra.mxu0 0.0
        %537 = vmatpush.msra.mxu0 0.0
        %538 = vmatpush.msra.mxu0 0.0
        %539 = vmatpush.msra.mxu0 0.0
        %540 = vmatpush.msra.mxu0 0.0
        %541 = vmatpush.msra.mxu0 0.0
        %542 = vmatpush.msra.mxu0 0.0
        %543 = vmatpush.msra.mxu0 0.0
        %544 = vmatpush.msra.mxu0 0.0
        %545 = vmatpush.msra.mxu0 0.0
        %546 = vmatpush.msra.mxu0 0.0
        %547 = vmatpush.msra.mxu0 0.0
        %548 = vmatpush.msra.mxu0 0.0
        %549 = vmatpush.msra.mxu0 0.0
        %550 = vmatpush.msra.mxu0 %v361
        %551 = vmatpush.msra.mxu0 %v360
        %552 = vmatmul.f32.gmra.mxu0 %v531
        %v553 = vpop.f32.mrf.mxu0
        %v554 = vadd.f32 0.0, %v553
        %555 = vmatmul.f32.gmra.mxu0 %v534
        %v556 = vpop.f32.mrf.mxu0
        %v557 = vadd.f32 0.0, %v556
        %558 = vdwg.mxu0
        %559 = vmatpush.msra.mxu0 0.0
        %560 = vmatpush.msra.mxu0 0.0
        %561 = vmatpush.msra.mxu0 0.0
        %562 = vmatpush.msra.mxu0 0.0
        %563 = vmatpush.msra.mxu0 0.0
        %564 = vmatpush.msra.mxu0 0.0
        %565 = vmatpush.msra.mxu0 0.0
        %566 = vmatpush.msra.mxu0 0.0
        %567 = vmatpush.msra.mxu0 0.0
        %568 = vmatpush.msra.mxu0 0.0
        %569 = vmatpush.msra.mxu0 0.0
        %570 = vmatpush.msra.mxu0 0.0
        %571 = vmatpush.msra.mxu0 0.0
        %572 = vmatpush.msra.mxu0 0.0
        %573 = vmatpush.msra.mxu0 %v557
        %574 = vmatpush.msra.mxu0 %v554
        %575 = vmatmul.f32.gmra.mxu0 %v442
        %v576 = vpop.f32.mrf.mxu0
        %v577 = vadd.f32 0.0, %v576
        %578 = vmatmul.f32.gmra.mxu0 %v445
        %v579 = vpop.f32.mrf.mxu0
        %v580 = vadd.f32 0.0, %v579
        %581 = vdwg.mxu0
        %582 = vmatpush.msra.mxu0 0.0
        %583 = vmatpush.msra.mxu0 0.0
        %584 = vmatpush.msra.mxu0 0.0
        %585 = vmatpush.msra.mxu0 0.0
        %586 = vmatpush.msra.mxu0 0.0
        %587 = vmatpush.msra.mxu0 0.0
        %588 = vmatpush.msra.mxu0 0.0
        %589 = vmatpush.msra.mxu0 0.0
        %590 = vmatpush.msra.mxu0 0.0
        %591 = vmatpush.msra.mxu0 0.0
        %592 = vmatpush.msra.mxu0 0.0
        %593 = vmatpush.msra.mxu0 0.0
        %594 = vmatpush.msra.mxu0 0.0
        %595 = vmatpush.msra.mxu0 0.0
        %596 = vmatpush.msra.mxu0 %v408
        %597 = vmatpush.msra.mxu0 %v405
        %598 = vmatmul.f32.gmra.mxu0 %v442
        %v599 = vpop.f32.mrf.mxu0
        %v600 = vadd.f32 1e-08, %v599
        %601 = vmatmul.f32.gmra.mxu0 %v445
        %v602 = vpop.f32.mrf.mxu0
        %v603 = vadd.f32 1e-08, %v602
        %604 = vdwg.mxu0
        %v605 = vrcp.pop %v600
        %v606 = vmul.f32 %v600, %v605
        %v607 = vsub.f32 1.0, %v606
        %v608 = vmul.f32 %v605, %v607
        %v609 = vadd.f32 %v605, %v608
        %vm610 = vweird.f32 %v600
        %vm611 = vweird.f32 %v605
        %vm612 = vmor %vm610, %vm611
        %v613 = vsel %vm612, %v605, %v609
        %v614 = vand.u32 2147483647, %v600
        %vm615 = vcmp.eq.f32.partialorder %v614, 8.507059e+37
        %v616 = vand.u32 %v600, 2147483648
        %v617 = vor.u32 1.1754944e-38, %v616
        %v618 = vsel %vm615, %v617, %v613
        %v619 = vmul.f32 1.0, %v618
        %v620 = vrcp.pop %v603
        %v621 = vmul.f32 %v603, %v620
        %v622 = vsub.f32 1.0, %v621
        %v623 = vmul.f32 %v620, %v622
        %v624 = vadd.f32 %v620, %v623
        %vm625 = vweird.f32 %v603
        %vm626 = vweird.f32 %v620
        %vm627 = vmor %vm625, %vm626
        %v628 = vsel %vm627, %v620, %v624
        %v629 = vand.u32 2147483647, %v603
        %vm630 = vcmp.eq.f32.partialorder %v629, 8.507059e+37
        %v631 = vand.u32 %v603, 2147483648
        %v632 = vor.u32 1.1754944e-38, %v631
        %v633 = vsel %vm630, %v632, %v628
        %v634 = vmul.f32 1.0, %v633
        %v635 = vmul.f32 %v465, %v619
        %v636 = vmul.f32 %v468, %v634
        %v637 = vmul.f32 %v635, %v378
        %v638 = vmul.f32 %v636, %v379
        %v639 = vsub.f32 1.0, %v378
        %v640 = vsub.f32 1.0, %v379
        %v641 = vadd.f32 %v637, %v639
        %v642 = vadd.f32 %v638, %v640
        %v643 = vmul.f32 %v521, %v619
        %v644 = vmul.f32 %v524, %v634
        %v645 = vmul.f32 %v643, %v378
        %v646 = vmul.f32 %v644, %v379
        %v647 = vmul.f32 %v577, %v619
        %v648 = vmul.f32 %v580, %v634
        %v649 = vmul.f32 %v647, %v378
        %v650 = vmul.f32 %v648, %v379
        %v651 = vmul.f32 %v366, %v366
        %v652 = vmul.f32 %v367, %v367
        %v653 = vmul.f32 %v368, %v368
        %v654 = vmul.f32 %v369, %v369
        %v655 = vmul.f32 %v370, %v370
        %v656 = vmul.f32 %v371, %v371
        %v657 = vmul.f32 %v372, %v372
        %v658 = vmul.f32 %v373, %v373
        %v659 = vmul.f32 %v651, %v645
        %v660 = vmul.f32 %v652, %v646
        %v661 = vmul.f32 %v653, %v645
        %v662 = vmul.f32 %v654, %v646
        %v663 = vmul.f32 %v655, %v645
        %v664 = vmul.f32 %v656, %v646
        %v665 = vmul.f32 %v657, %v645
        %v666 = vmul.f32 %v658, %v646
        %v667 = vmul.f32 %v651, %v649
        %v668 = vmul.f32 %v652, %v650
        %v669 = vmul.f32 %v653, %v649
        %v670 = vmul.f32 %v654, %v650
        %v671 = vmul.f32 %v655, %v649
        %v672 = vmul.f32 %v656, %v650
        %v673 = vmul.f32 %v657, %v649
        %v674 = vmul.f32 %v658, %v650
        %v675 = vsel %vm380, %v659, 0.0
        %676 = vadd.xlane.f32.xlu0 %v675
        %v677 = vpop.xlane.xlu0 %676
        %v678 = vsel %vm380, %v660, 0.0
        %679 = vadd.xlane.f32.xlu0 %v678
        %v680 = vpop.xlane.xlu0 %679
        %v681 = vsel %vm380, %v661, 0.0
        %682 = vadd.xlane.f32.xlu0 %v681
        %v683 = vpop.xlane.xlu0 %682
        %v684 = vsel %vm380, %v662, 0.0
        %685 = vadd.xlane.f32.xlu0 %v684
        %v686 = vpop.xlane.xlu0 %685
        %v687 = vsel %vm380, %v663, 0.0
        %688 = vadd.xlane.f32.xlu0 %v687
        %v689 = vpop.xlane.xlu0 %688
        %v690 = vsel %vm380, %v664, 0.0
        %691 = vadd.xlane.f32.xlu0 %v690
        %v692 = vpop.xlane.xlu0 %691
        %v693 = vsel %vm380, %v665, 0.0
        %694 = vadd.xlane.f32.xlu0 %v693
        %v695 = vpop.xlane.xlu0 %694
        %v696 = vsel %vm380, %v666, 0.0
        %697 = vadd.xlane.f32.xlu0 %v696
        %v698 = vpop.xlane.xlu0 %697
        %v699 = vadd.f32 %v677, %v680
        %v700 = vrot.slane %v699, 4
        %v701 = vadd.f32 %v699, %v700
        %v702 = vrot.slane %v701, 2
        %v703 = vadd.f32 %v701, %v702
        %v704 = vrot.slane %v703, 1
        %v705 = vadd.f32 %v703, %v704
        %v706 = vadd.f32 %v683, %v686
        %v707 = vrot.slane %v706, 4
        %v708 = vadd.f32 %v706, %v707
        %v709 = vrot.slane %v708, 2
        %v710 = vadd.f32 %v708, %v709
        %v711 = vrot.slane %v710, 1
        %v712 = vadd.f32 %v710, %v711
        %v713 = vadd.f32 %v689, %v692
        %v714 = vrot.slane %v713, 4
        %v715 = vadd.f32 %v713, %v714
        %v716 = vrot.slane %v715, 2
        %v717 = vadd.f32 %v715, %v716
        %v718 = vrot.slane %v717, 1
        %v719 = vadd.f32 %v717, %v718
        %v720 = vadd.f32 %v695, %v698
        %v721 = vrot.slane %v720, 4
        %v722 = vadd.f32 %v720, %v721
        %v723 = vrot.slane %v722, 2
        %v724 = vadd.f32 %v722, %v723
        %v725 = vrot.slane %v724, 1
        %v726 = vadd.f32 %v724, %v725
        %v727 = vsel %vm380, %v667, 0.0
        %728 = vadd.xlane.f32.xlu0 %v727
        %v729 = vpop.xlane.xlu0 %728
        %v730 = vsel %vm380, %v668, 0.0
        %731 = vadd.xlane.f32.xlu0 %v730
        %v732 = vpop.xlane.xlu0 %731
        %v733 = vsel %vm380, %v669, 0.0
        %734 = vadd.xlane.f32.xlu0 %v733
        %v735 = vpop.xlane.xlu0 %734
        %v736 = vsel %vm380, %v670, 0.0
        %737 = vadd.xlane.f32.xlu0 %v736
        %v738 = vpop.xlane.xlu0 %737
        %v739 = vsel %vm380, %v671, 0.0
        %740 = vadd.xlane.f32.xlu0 %v739
        %v741 = vpop.xlane.xlu0 %740
        %v742 = vsel %vm380, %v672, 0.0
        %743 = vadd.xlane.f32.xlu0 %v742
        %v744 = vpop.xlane.xlu0 %743
        %v745 = vsel %vm380, %v673, 0.0
        %746 = vadd.xlane.f32.xlu0 %v745
        %v747 = vpop.xlane.xlu0 %746
        %v748 = vsel %vm380, %v674, 0.0
        %749 = vadd.xlane.f32.xlu0 %v748
        %v750 = vpop.xlane.xlu0 %749
        %v751 = vadd.f32 %v729, %v732
        %v752 = vrot.slane %v751, 4
        %v753 = vadd.f32 %v751, %v752
        %v754 = vrot.slane %v753, 2
        %v755 = vadd.f32 %v753, %v754
        %v756 = vrot.slane %v755, 1
        %v757 = vadd.f32 %v755, %v756
        %v758 = vadd.f32 %v735, %v738
        %v759 = vrot.slane %v758, 4
        %v760 = vadd.f32 %v758, %v759
        %v761 = vrot.slane %v760, 2
        %v762 = vadd.f32 %v760, %v761
        %v763 = vrot.slane %v762, 1
        %v764 = vadd.f32 %v762, %v763
        %v765 = vadd.f32 %v741, %v744
        %v766 = vrot.slane %v765, 4
        %v767 = vadd.f32 %v765, %v766
        %v768 = vrot.slane %v767, 2
        %v769 = vadd.f32 %v767, %v768
        %v770 = vrot.slane %v769, 1
        %v771 = vadd.f32 %v769, %v770
        %v772 = vadd.f32 %v747, %v750
        %v773 = vrot.slane %v772, 4
        %v774 = vadd.f32 %v772, %v773
        %v775 = vrot.slane %v774, 2
        %v776 = vadd.f32 %v774, %v775
        %v777 = vrot.slane %v776, 1
        %v778 = vadd.f32 %v776, %v777
        %v779 = vadd.f32 %v757, 1e-08
        %v780 = vadd.f32 %v764, 1e-08
        %v781 = vadd.f32 %v771, 1e-08
        %v782 = vadd.f32 %v778, 1e-08
        %v783 = vrcp.pop %v779
        %v784 = vmul.f32 %v779, %v783
        %v785 = vsub.f32 1.0, %v784
        %v786 = vmul.f32 %v783, %v785
        %v787 = vadd.f32 %v783, %v786
        %vm788 = vweird.f32 %v779
        %vm789 = vweird.f32 %v783
        %vm790 = vmor %vm788, %vm789
        %v791 = vsel %vm790, %v783, %v787
        %v792 = vand.u32 2147483647, %v779
        %vm793 = vcmp.eq.f32.partialorder %v792, 8.507059e+37
        %v794 = vand.u32 %v779, 2147483648
        %v795 = vor.u32 1.1754944e-38, %v794
        %v796 = vsel %vm793, %v795, %v791
        %v797 = vmul.f32 %v705, %v796
        %v798 = vrcp.pop %v780
        %v799 = vmul.f32 %v780, %v798
        %v800 = vsub.f32 1.0, %v799
        %v801 = vmul.f32 %v798, %v800
        %v802 = vadd.f32 %v798, %v801
        %vm803 = vweird.f32 %v780
        %vm804 = vweird.f32 %v798
        %vm805 = vmor %vm803, %vm804
        %v806 = vsel %vm805, %v798, %v802
        %v807 = vand.u32 2147483647, %v780
        %vm808 = vcmp.eq.f32.partialorder %v807, 8.507059e+37
        %v809 = vand.u32 %v780, 2147483648
        %v810 = vor.u32 1.1754944e-38, %v809
        %v811 = vsel %vm808, %v810, %v806
        %v812 = vmul.f32 %v712, %v811
        %v813 = vrcp.pop %v781
        %v814 = vmul.f32 %v781, %v813
        %v815 = vsub.f32 1.0, %v814
        %v816 = vmul.f32 %v813, %v815
        %v817 = vadd.f32 %v813, %v816
        %vm818 = vweird.f32 %v781
        %vm819 = vweird.f32 %v813
        %vm820 = vmor %vm818, %vm819
        %v821 = vsel %vm820, %v813, %v817
        %v822 = vand.u32 2147483647, %v781
        %vm823 = vcmp.eq.f32.partialorder %v822, 8.507059e+37
        %v824 = vand.u32 %v781, 2147483648
        %v825 = vor.u32 1.1754944e-38, %v824
        %v826 = vsel %vm823, %v825, %v821
        %v827 = vmul.f32 %v719, %v826
        %v828 = vrcp.pop %v782
        %v829 = vmul.f32 %v782, %v828
        %v830 = vsub.f32 1.0, %v829
        %v831 = vmul.f32 %v828, %v830
        %v832 = vadd.f32 %v828, %v831
        %vm833 = vweird.f32 %v782
        %vm834 = vweird.f32 %v828
        %vm835 = vmor %vm833, %vm834
        %v836 = vsel %vm835, %v828, %v832
        %v837 = vand.u32 2147483647, %v782
        %vm838 = vcmp.eq.f32.partialorder %v837, 8.507059e+37
        %v839 = vand.u32 %v782, 2147483648
        %v840 = vor.u32 1.1754944e-38, %v839
        %v841 = vsel %vm838, %v840, %v836
        %v842 = vmul.f32 %v726, %v841
        %v843 = vmul.f32 %v797, %v641
        %v844 = vmul.f32 %v797, %v642
        %v845 = vmul.f32 %v812, %v641
        %v846 = vmul.f32 %v812, %v642
        %v847 = vmul.f32 %v827, %v641
        %v848 = vmul.f32 %v827, %v642
        %v849 = vmul.f32 %v842, %v641
        %v850 = vmul.f32 %v842, %v642
        %v851 = vsub.f32 %v362, %v843
        %v852 = vsub.f32 %v363, %v844
        %v853 = vsub.f32 %v362, %v845
        %v854 = vsub.f32 %v363, %v846
        %v855 = vsub.f32 %v362, %v847
        %v856 = vsub.f32 %v363, %v848
        %v857 = vsub.f32 %v362, %v849
        %v858 = vsub.f32 %v363, %v850
        %v859 = vmul.f32 %v851, %v851
        %v860 = vmul.f32 %v852, %v852
        %v861 = vmul.f32 %v853, %v853
        %v862 = vmul.f32 %v854, %v854
        %v863 = vmul.f32 %v855, %v855
        %v864 = vmul.f32 %v856, %v856
        %v865 = vmul.f32 %v857, %v857
        %v866 = vmul.f32 %v858, %v858
        %v867 = vadd.f32 %v859, 1e-09
        %v868 = vadd.f32 %v860, 1e-09
        %v869 = vadd.f32 %v861, 1e-09
        %v870 = vadd.f32 %v862, 1e-09
        %v871 = vadd.f32 %v863, 1e-09
        %v872 = vadd.f32 %v864, 1e-09
        %v873 = vadd.f32 %v865, 1e-09
        %v874 = vadd.f32 %v866, 1e-09
        %v875 = vrcp.pop %v867
        %v876 = vmul.f32 %v867, %v875
        %v877 = vsub.f32 1.0, %v876
        %v878 = vmul.f32 %v875, %v877
        %v879 = vadd.f32 %v875, %v878
        %vm880 = vweird.f32 %v867
        %vm881 = vweird.f32 %v875
        %vm882 = vmor %vm880, %vm881
        %v883 = vsel %vm882, %v875, %v879
        %v884 = vand.u32 2147483647, %v867
        %vm885 = vcmp.eq.f32.partialorder %v884, 8.507059e+37
        %v886 = vand.u32 %v867, 2147483648
        %v887 = vor.u32 1.1754944e-38, %v886
        %v888 = vsel %vm885, %v887, %v883
        %v889 = vmul.f32 1.0, %v888
        %v890 = vrcp.pop %v868
        %v891 = vmul.f32 %v868, %v890
        %v892 = vsub.f32 1.0, %v891
        %v893 = vmul.f32 %v890, %v892
        %v894 = vadd.f32 %v890, %v893
        %vm895 = vweird.f32 %v868
        %vm896 = vweird.f32 %v890
        %vm897 = vmor %vm895, %vm896
        %v898 = vsel %vm897, %v890, %v894
        %v899 = vand.u32 2147483647, %v868
        %vm900 = vcmp.eq.f32.partialorder %v899, 8.507059e+37
        %v901 = vand.u32 %v868, 2147483648
        %v902 = vor.u32 1.1754944e-38, %v901
        %v903 = vsel %vm900, %v902, %v898
        %v904 = vmul.f32 1.0, %v903
        %v905 = vrcp.pop %v869
        %v906 = vmul.f32 %v869, %v905
        %v907 = vsub.f32 1.0, %v906
        %v908 = vmul.f32 %v905, %v907
        %v909 = vadd.f32 %v905, %v908
        %vm910 = vweird.f32 %v869
        %vm911 = vweird.f32 %v905
        %vm912 = vmor %vm910, %vm911
        %v913 = vsel %vm912, %v905, %v909
        %v914 = vand.u32 2147483647, %v869
        %vm915 = vcmp.eq.f32.partialorder %v914, 8.507059e+37
        %v916 = vand.u32 %v869, 2147483648
        %v917 = vor.u32 1.1754944e-38, %v916
        %v918 = vsel %vm915, %v917, %v913
        %v919 = vmul.f32 1.0, %v918
        %v920 = vrcp.pop %v870
        %v921 = vmul.f32 %v870, %v920
        %v922 = vsub.f32 1.0, %v921
        %v923 = vmul.f32 %v920, %v922
        %v924 = vadd.f32 %v920, %v923
        %vm925 = vweird.f32 %v870
        %vm926 = vweird.f32 %v920
        %vm927 = vmor %vm925, %vm926
        %v928 = vsel %vm927, %v920, %v924
        %v929 = vand.u32 2147483647, %v870
        %vm930 = vcmp.eq.f32.partialorder %v929, 8.507059e+37
        %v931 = vand.u32 %v870, 2147483648
        %v932 = vor.u32 1.1754944e-38, %v931
        %v933 = vsel %vm930, %v932, %v928
        %v934 = vmul.f32 1.0, %v933
        %v935 = vrcp.pop %v871
        %v936 = vmul.f32 %v871, %v935
        %v937 = vsub.f32 1.0, %v936
        %v938 = vmul.f32 %v935, %v937
        %v939 = vadd.f32 %v935, %v938
        %vm940 = vweird.f32 %v871
        %vm941 = vweird.f32 %v935
        %vm942 = vmor %vm940, %vm941
        %v943 = vsel %vm942, %v935, %v939
        %v944 = vand.u32 2147483647, %v871
        %vm945 = vcmp.eq.f32.partialorder %v944, 8.507059e+37
        %v946 = vand.u32 %v871, 2147483648
        %v947 = vor.u32 1.1754944e-38, %v946
        %v948 = vsel %vm945, %v947, %v943
        %v949 = vmul.f32 1.0, %v948
        %v950 = vrcp.pop %v872
        %v951 = vmul.f32 %v872, %v950
        %v952 = vsub.f32 1.0, %v951
        %v953 = vmul.f32 %v950, %v952
        %v954 = vadd.f32 %v950, %v953
        %vm955 = vweird.f32 %v872
        %vm956 = vweird.f32 %v950
        %vm957 = vmor %vm955, %vm956
        %v958 = vsel %vm957, %v950, %v954
        %v959 = vand.u32 2147483647, %v872
        %vm960 = vcmp.eq.f32.partialorder %v959, 8.507059e+37
        %v961 = vand.u32 %v872, 2147483648
        %v962 = vor.u32 1.1754944e-38, %v961
        %v963 = vsel %vm960, %v962, %v958
        %v964 = vmul.f32 1.0, %v963
        %v965 = vrcp.pop %v873
        %v966 = vmul.f32 %v873, %v965
        %v967 = vsub.f32 1.0, %v966
        %v968 = vmul.f32 %v965, %v967
        %v969 = vadd.f32 %v965, %v968
        %vm970 = vweird.f32 %v873
        %vm971 = vweird.f32 %v965
        %vm972 = vmor %vm970, %vm971
        %v973 = vsel %vm972, %v965, %v969
        %v974 = vand.u32 2147483647, %v873
        %vm975 = vcmp.eq.f32.partialorder %v974, 8.507059e+37
        %v976 = vand.u32 %v873, 2147483648
        %v977 = vor.u32 1.1754944e-38, %v976
        %v978 = vsel %vm975, %v977, %v973
        %v979 = vmul.f32 1.0, %v978
        %v980 = vrcp.pop %v874
        %v981 = vmul.f32 %v874, %v980
        %v982 = vsub.f32 1.0, %v981
        %v983 = vmul.f32 %v980, %v982
        %v984 = vadd.f32 %v980, %v983
        %vm985 = vweird.f32 %v874
        %vm986 = vweird.f32 %v980
        %vm987 = vmor %vm985, %vm986
        %v988 = vsel %vm987, %v980, %v984
        %v989 = vand.u32 2147483647, %v874
        %vm990 = vcmp.eq.f32.partialorder %v989, 8.507059e+37
        %v991 = vand.u32 %v874, 2147483648
        %v992 = vor.u32 1.1754944e-38, %v991
        %v993 = vsel %vm990, %v992, %v988
        %v994 = vmul.f32 1.0, %v993
        %v995 = vsel %vm380, %v889, 0.0
        %v996 = vsel %vm380, %v919, 0.0
        %v997 = vadd.f32 %v995, %v996
        %v998 = vsel %vm380, %v949, 0.0
        %v999 = vadd.f32 %v997, %v998
        %v1000 = vsel %vm380, %v979, 0.0
        %v1001 = vadd.f32 %v999, %v1000
        %v1002 = vsel %vm380, %v904, 0.0
        %v1003 = vsel %vm380, %v934, 0.0
        %v1004 = vadd.f32 %v1002, %v1003
        %v1005 = vsel %vm380, %v964, 0.0
        %v1006 = vadd.f32 %v1004, %v1005
        %v1007 = vsel %vm380, %v994, 0.0
        %v1008 = vadd.f32 %v1006, %v1007
        %v1009 = vmul.f32 %v867, %v1001
        %v1010 = vmul.f32 %v868, %v1008
        %v1011 = vmul.f32 %v869, %v1001
        %v1012 = vmul.f32 %v870, %v1008
        %v1013 = vmul.f32 %v871, %v1001
        %v1014 = vmul.f32 %v872, %v1008
        %v1015 = vmul.f32 %v873, %v1001
        %v1016 = vmul.f32 %v874, %v1008
        %v1017 = vadd.f32 %v1009, 1e-09
        %v1018 = vadd.f32 %v1010, 1e-09
        %v1019 = vadd.f32 %v1011, 1e-09
        %v1020 = vadd.f32 %v1012, 1e-09
        %v1021 = vadd.f32 %v1013, 1e-09
        %v1022 = vadd.f32 %v1014, 1e-09
        %v1023 = vadd.f32 %v1015, 1e-09
        %v1024 = vadd.f32 %v1016, 1e-09
        %v1025 = vrcp.pop %v1017
        %v1026 = vmul.f32 %v1017, %v1025
        %v1027 = vsub.f32 1.0, %v1026
        %v1028 = vmul.f32 %v1025, %v1027
        %v1029 = vadd.f32 %v1025, %v1028
        %vm1030 = vweird.f32 %v1017
        %vm1031 = vweird.f32 %v1025
        %vm1032 = vmor %vm1030, %vm1031
        %v1033 = vsel %vm1032, %v1025, %v1029
        %v1034 = vand.u32 2147483647, %v1017
        %vm1035 = vcmp.eq.f32.partialorder %v1034, 8.507059e+37
        %v1036 = vand.u32 %v1017, 2147483648
        %v1037 = vor.u32 1.1754944e-38, %v1036
        %v1038 = vsel %vm1035, %v1037, %v1033
        %v1039 = vmul.f32 1.0, %v1038
        %v1040 = vrcp.pop %v1018
        %v1041 = vmul.f32 %v1018, %v1040
        %v1042 = vsub.f32 1.0, %v1041
        %v1043 = vmul.f32 %v1040, %v1042
        %v1044 = vadd.f32 %v1040, %v1043
        %vm1045 = vweird.f32 %v1018
        %vm1046 = vweird.f32 %v1040
        %vm1047 = vmor %vm1045, %vm1046
        %v1048 = vsel %vm1047, %v1040, %v1044
        %v1049 = vand.u32 2147483647, %v1018
        %vm1050 = vcmp.eq.f32.partialorder %v1049, 8.507059e+37
        %v1051 = vand.u32 %v1018, 2147483648
        %v1052 = vor.u32 1.1754944e-38, %v1051
        %v1053 = vsel %vm1050, %v1052, %v1048
        %v1054 = vmul.f32 1.0, %v1053
        %v1055 = vrcp.pop %v1019
        %v1056 = vmul.f32 %v1019, %v1055
        %v1057 = vsub.f32 1.0, %v1056
        %v1058 = vmul.f32 %v1055, %v1057
        %v1059 = vadd.f32 %v1055, %v1058
        %vm1060 = vweird.f32 %v1019
        %vm1061 = vweird.f32 %v1055
        %vm1062 = vmor %vm1060, %vm1061
        %v1063 = vsel %vm1062, %v1055, %v1059
        %v1064 = vand.u32 2147483647, %v1019
        %vm1065 = vcmp.eq.f32.partialorder %v1064, 8.507059e+37
        %v1066 = vand.u32 %v1019, 2147483648
        %v1067 = vor.u32 1.1754944e-38, %v1066
        %v1068 = vsel %vm1065, %v1067, %v1063
        %v1069 = vmul.f32 1.0, %v1068
        %v1070 = vrcp.pop %v1020
        %v1071 = vmul.f32 %v1020, %v1070
        %v1072 = vsub.f32 1.0, %v1071
        %v1073 = vmul.f32 %v1070, %v1072
        %v1074 = vadd.f32 %v1070, %v1073
        %vm1075 = vweird.f32 %v1020
        %vm1076 = vweird.f32 %v1070
        %vm1077 = vmor %vm1075, %vm1076
        %v1078 = vsel %vm1077, %v1070, %v1074
        %v1079 = vand.u32 2147483647, %v1020
        %vm1080 = vcmp.eq.f32.partialorder %v1079, 8.507059e+37
        %v1081 = vand.u32 %v1020, 2147483648
        %v1082 = vor.u32 1.1754944e-38, %v1081
        %v1083 = vsel %vm1080, %v1082, %v1078
        %v1084 = vmul.f32 1.0, %v1083
        %v1085 = vrcp.pop %v1021
        %v1086 = vmul.f32 %v1021, %v1085
        %v1087 = vsub.f32 1.0, %v1086
        %v1088 = vmul.f32 %v1085, %v1087
        %v1089 = vadd.f32 %v1085, %v1088
        %vm1090 = vweird.f32 %v1021
        %vm1091 = vweird.f32 %v1085
        %vm1092 = vmor %vm1090, %vm1091
        %v1093 = vsel %vm1092, %v1085, %v1089
        %v1094 = vand.u32 2147483647, %v1021
        %vm1095 = vcmp.eq.f32.partialorder %v1094, 8.507059e+37
        %v1096 = vand.u32 %v1021, 2147483648
        %v1097 = vor.u32 1.1754944e-38, %v1096
        %v1098 = vsel %vm1095, %v1097, %v1093
        %v1099 = vmul.f32 1.0, %v1098
        %v1100 = vrcp.pop %v1022
        %v1101 = vmul.f32 %v1022, %v1100
        %v1102 = vsub.f32 1.0, %v1101
        %v1103 = vmul.f32 %v1100, %v1102
        %v1104 = vadd.f32 %v1100, %v1103
        %vm1105 = vweird.f32 %v1022
        %vm1106 = vweird.f32 %v1100
        %vm1107 = vmor %vm1105, %vm1106
        %v1108 = vsel %vm1107, %v1100, %v1104
        %v1109 = vand.u32 2147483647, %v1022
        %vm1110 = vcmp.eq.f32.partialorder %v1109, 8.507059e+37
        %v1111 = vand.u32 %v1022, 2147483648
        %v1112 = vor.u32 1.1754944e-38, %v1111
        %v1113 = vsel %vm1110, %v1112, %v1108
        %v1114 = vmul.f32 1.0, %v1113
        %v1115 = vrcp.pop %v1023
        %v1116 = vmul.f32 %v1023, %v1115
        %v1117 = vsub.f32 1.0, %v1116
        %v1118 = vmul.f32 %v1115, %v1117
        %v1119 = vadd.f32 %v1115, %v1118
        %vm1120 = vweird.f32 %v1023
        %vm1121 = vweird.f32 %v1115
        %vm1122 = vmor %vm1120, %vm1121
        %v1123 = vsel %vm1122, %v1115, %v1119
        %v1124 = vand.u32 2147483647, %v1023
        %vm1125 = vcmp.eq.f32.partialorder %v1124, 8.507059e+37
        %v1126 = vand.u32 %v1023, 2147483648
        %v1127 = vor.u32 1.1754944e-38, %v1126
        %v1128 = vsel %vm1125, %v1127, %v1123
        %v1129 = vmul.f32 1.0, %v1128
        %v1130 = vrcp.pop %v1024
        %v1131 = vmul.f32 %v1024, %v1130
        %v1132 = vsub.f32 1.0, %v1131
        %v1133 = vmul.f32 %v1130, %v1132
        %v1134 = vadd.f32 %v1130, %v1133
        %vm1135 = vweird.f32 %v1024
        %vm1136 = vweird.f32 %v1130
        %vm1137 = vmor %vm1135, %vm1136
        %v1138 = vsel %vm1137, %v1130, %v1134
        %v1139 = vand.u32 2147483647, %v1024
        %vm1140 = vcmp.eq.f32.partialorder %v1139, 8.507059e+37
        %v1141 = vand.u32 %v1024, 2147483648
        %v1142 = vor.u32 1.1754944e-38, %v1141
        %v1143 = vsel %vm1140, %v1142, %v1138
        %v1144 = vmul.f32 1.0, %v1143
        %v1145 = vsub.f32 %v366, %v1039
        %v1146 = vsub.f32 %v367, %v1054
        %v1147 = vsub.f32 %v368, %v1069
        %v1148 = vsub.f32 %v369, %v1084
        %v1149 = vsub.f32 %v370, %v1099
        %v1150 = vsub.f32 %v371, %v1114
        %v1151 = vsub.f32 %v372, %v1129
        %v1152 = vsub.f32 %v373, %v1144
        %v1153 = vmul.f32 %v1145, %v1145
        %v1154 = vmul.f32 %v1146, %v1146
        %v1155 = vmul.f32 %v1147, %v1147
        %v1156 = vmul.f32 %v1148, %v1148
        %v1157 = vmul.f32 %v1149, %v1149
        %v1158 = vmul.f32 %v1150, %v1150
        %v1159 = vmul.f32 %v1151, %v1151
        %v1160 = vmul.f32 %v1152, %v1152
        %v1161 = vsel %vm380, %v1153, 0.0
        %1162 = vadd.xlane.f32.xlu0 %v1161
        %v1163 = vpop.xlane.xlu0 %1162
        %v1164 = vsel %vm380, %v1154, 0.0
        %1165 = vadd.xlane.f32.xlu0 %v1164
        %v1166 = vpop.xlane.xlu0 %1165
        %v1167 = vsel %vm380, %v1155, 0.0
        %1168 = vadd.xlane.f32.xlu0 %v1167
        %v1169 = vpop.xlane.xlu0 %1168
        %v1170 = vsel %vm380, %v1156, 0.0
        %1171 = vadd.xlane.f32.xlu0 %v1170
        %v1172 = vpop.xlane.xlu0 %1171
        %v1173 = vsel %vm380, %v1157, 0.0
        %1174 = vadd.xlane.f32.xlu0 %v1173
        %v1175 = vpop.xlane.xlu0 %1174
        %v1176 = vsel %vm380, %v1158, 0.0
        %1177 = vadd.xlane.f32.xlu0 %v1176
        %v1178 = vpop.xlane.xlu0 %1177
        %v1179 = vsel %vm380, %v1159, 0.0
        %1180 = vadd.xlane.f32.xlu0 %v1179
        %v1181 = vpop.xlane.xlu0 %1180
        %v1182 = vsel %vm380, %v1160, 0.0
        %1183 = vadd.xlane.f32.xlu0 %v1182
        %v1184 = vpop.xlane.xlu0 %1183
        %v1185 = vadd.f32 %v1163, %v1166
        %v1186 = vrot.slane %v1185, 4
        %v1187 = vadd.f32 %v1185, %v1186
        %v1188 = vrot.slane %v1187, 2
        %v1189 = vadd.f32 %v1187, %v1188
        %v1190 = vrot.slane %v1189, 1
        %v1191 = vadd.f32 %v1189, %v1190
        %v1192 = vadd.f32 %v1169, %v1172
        %v1193 = vrot.slane %v1192, 4
        %v1194 = vadd.f32 %v1192, %v1193
        %v1195 = vrot.slane %v1194, 2
        %v1196 = vadd.f32 %v1194, %v1195
        %v1197 = vrot.slane %v1196, 1
        %v1198 = vadd.f32 %v1196, %v1197
        %v1199 = vadd.f32 %v1175, %v1178
        %v1200 = vrot.slane %v1199, 4
        %v1201 = vadd.f32 %v1199, %v1200
        %v1202 = vrot.slane %v1201, 2
        %v1203 = vadd.f32 %v1201, %v1202
        %v1204 = vrot.slane %v1203, 1
        %v1205 = vadd.f32 %v1203, %v1204
        %v1206 = vadd.f32 %v1181, %v1184
        %v1207 = vrot.slane %v1206, 4
        %v1208 = vadd.f32 %v1206, %v1207
        %v1209 = vrot.slane %v1208, 2
        %v1210 = vadd.f32 %v1208, %v1209
        %v1211 = vrot.slane %v1210, 1
        %v1212 = vadd.f32 %v1210, %v1211
        %v1213 = vadd.f32 %v1191, %v1198
        %v1214 = vadd.f32 %v1213, %v1205
        %v1215 = vadd.f32 %v1214, %v1212
        %v1216 = vmul.f32 %v1215, 0.0009765625
        %1217 = vst [vmem:[%s357] sm:$0x1] %v1216
        %s1218 = sand.u32 %s154, 1
        %s1219 = scalar_lea.sflag [#allocation4], %s1218
        %s1220 = sand.u32 %s154, 1
        %s1221 = scalar_lea.vmem [#allocation11], %s1220
        // Predicated region
        $region61: #{tpu_custom_call.1} parent=39 // pred_check
          %p1222 = pneg %p164
        $region62: #{tpu_custom_call.1} parent=39 // pred_check_branch
          %1224 = sbr.rel (%p1222) target = $region64
        $region63: #{tpu_custom_call.1} parent=39 // pred_region
          %1226 = vsyncadd %s1219, 0
          %s1227 = scalar_lea.hbm %s5, %s26
          %s1229 = sshll.u32 %s1221, 4
          %s1230 = int_to_ptr.vmem [resolvable:$true] %s1229
          %s1231 = sshll.u32 %s1227, 4
          %s1232 = int_to_ptr.hbm [resolvable:$true] %s1231
          %1234 = dma.vmem_to_hbm [thread:$0]  %s1230, 16, %s1232, %s1219
        $region64: #{tpu_custom_call.1} parent=39 // pred_fallthru
          _
      $region40: #{tpu_custom_call.1} parent=5 // pred_fallthru
        _
      %p1235 = scmp.le.s32.totalorder 2, %s21
      // Predicated region
      $region65: #{tpu_custom_call.1} parent=5 // pred_check
        %p1236 = pneg %p1235
      $region66: #{tpu_custom_call.1} parent=5 // pred_check_branch
        %1238 = sbr.rel (%p1236) target = $region68
      $region67: #{tpu_custom_call.1} parent=5 // pred_region
        %s1239 = ssub.s32 %s21, 2
        // Predicated region
        $region69: #{tpu_custom_call.1} parent=67 // pred_check
          %p1240 = pneg %p170
        $region70: #{tpu_custom_call.1} parent=67 // pred_check_branch
          %1242 = sbr.rel (%p1240) target = $region72
        $region71: #{tpu_custom_call.1} parent=67 // pred_region
          %s1243 = sand.u32 %s155, 1
          %s1244 = scalar_lea.sflag [#allocation4], %s1243
          %s1245 = sand.u32 %s155, 1
          %s1246 = scalar_lea.vmem [#allocation11], %s1245
          %1248 = dma.done %s1244, 16
        $region72: #{tpu_custom_call.1} parent=67 // pred_fallthru
          _
      $region68: #{tpu_custom_call.1} parent=5 // pred_fallthru
        _
    $region6: #{tpu_custom_call.1} parent=1 // loop_footer
      %s25 = sadd.s32 1, %s21
    $region7: #{tpu_custom_call.1} parent=1 // loop_footer_branch
      %20 = sbr.rel target = $region3
    $region8: #{tpu_custom_call.1} parent=1 // loop_exit
      _
    %1249 = vsyncpa [#allocation3], 1
    %s1250 = scalar_lea.sflag [#allocation3], 1
    %1251 = vsyncpa %s1250, 1
    %1252 = vsyncpa [#allocation6], 1
    %s1253 = scalar_lea.sflag [#allocation6], 1
    %1254 = vsyncpa %s1253, 1
    %1255 = vsyncpa [#allocation9], 1
    %1256 = vsyncpa [#allocation4], 1
    %s1257 = scalar_lea.sflag [#allocation4], 1
    %1258 = vsyncpa %s1257, 1

</llo_original>
